<compile_context>
chip_gen: v5e
topology: v5e:2x2
jax: 0.10.0
libtpu: 0.0.40
codegen_flags: <defaults>
</compile_context>

<pallas_src>
import math

import numpy as np

import jax
import jax.numpy as jnp
from jax.experimental import pallas as pl
from jax.experimental.pallas import tpu as pltpu

ENCODER_SAMPLE_RATE = 16000   # hubert_config['sample_rate'] default
ENCODER_HOP_SIZE = 320        # hubert_config['hop_size'] default
HUBERT_WIN = 400              # HuBERT minimum input / receptive field
UNITS_DIM = 256               # HuBERT-soft units dimension
W1_PAD = 128                  # tail weight (80 rows) padded to one lane tile


def _round_up(x, m):
    return (x + m - 1) // m * m


# --------------------------------------------------------------------------
# Fused kernel: windowed audio gather (MXU one-hot) + projection + tanh
# --------------------------------------------------------------------------
def _fused_units_kernel(base_ref, lidx_ref, a0_ref, a1_ref,
                        w0_ref, w1_ref, b_ref, out_ref):
    # For output row i in this tile, the encoder frame is
    #   units[idx] = tanh( A[idx] @ W[:320] + A[idx+1, :80] @ W[320:400] + b )
    # where A = audio.reshape(-1, 320) and idx = base*u_tile + lidx[i].
    # a0_ref / a1_ref are audio blocks base and base+1; both needed rows
    # (lidx and lidx+1, with lidx <= 2*u_tile - 2) live in their union.
    del base_ref                                           # used by index_maps only
    lidx = lidx_ref[...]                                   # (to_tile, 1) int32
    to_tile = lidx.shape[0]
    u_tile = a0_ref.shape[0]
    lane = jax.lax.broadcasted_iota(jnp.int32, (to_tile, u_tile), 1)
    bf = jnp.bfloat16
    oh_a = (lane == lidx).astype(bf)                       # main row from window A
    oh_b = ((lane + u_tile) == lidx).astype(bf)            # main row from window B
    oh_at = (lane == (lidx + 1)).astype(bf)                # tail row from window A
    oh_bt = ((lane + u_tile) == (lidx + 1)).astype(bf)     # tail row from window B

    a0 = a0_ref[...]                                       # (u_tile, 320) bf16
    a1 = a1_ref[...]
    # Exact bf16 selection (one-hot entries are exact, audio already bf16).
    g_main = (jnp.dot(oh_a, a0, preferred_element_type=jnp.float32)
              + jnp.dot(oh_b, a1, preferred_element_type=jnp.float32)).astype(bf)
    g_tail = (jnp.dot(oh_at, a0[:, :W1_PAD], preferred_element_type=jnp.float32)
              + jnp.dot(oh_bt, a1[:, :W1_PAD], preferred_element_type=jnp.float32)
              ).astype(bf)

    y = jnp.dot(g_main, w0_ref[...], preferred_element_type=jnp.float32)
    y = y + jnp.dot(g_tail, w1_ref[...], preferred_element_type=jnp.float32)
    out_ref[...] = jnp.tanh(y + b_ref[...])                # (to_tile, 256) f32


# --------------------------------------------------------------------------
# Wrapper: UnitsEncoder.forward (hubert-style encoder branch)
# --------------------------------------------------------------------------
def units_encoder_forward(audio, sample_rate, hop_size, w, b):
    """audio: (1, T) float32  ->  (1, n_frames, UNITS_DIM) float32."""
    assert audio.ndim == 2 and audio.shape[0] == 1
    # TODO(synk): 'mel' encoder branch (MelSpecExtractor) not implemented.
    # TODO(synk): torchaudio Resample (sinc lowpass, width=128) branch not
    # implemented; this port requires sample_rate == encoder_sample_rate.
    assert sample_rate == ENCODER_SAMPLE_RATE

    audio_res = audio
    if audio_res.shape[-1] < HUBERT_WIN:
        audio_res = jnp.pad(audio, ((0, 0), (0, HUBERT_WIN - audio_res.shape[-1])))

    t = audio_res.shape[-1]
    t_units = (t - HUBERT_WIN) // ENCODER_HOP_SIZE + 1       # encoder frames

    n_frames = audio.shape[-1] // hop_size + 1               # aligned frames
    ratio = (hop_size / sample_rate) / (ENCODER_HOP_SIZE / ENCODER_SAMPLE_RATE)

    # ---- output tiling (large lane-dense tiles; shrink only for huge ratio) --
    to_tile = 256
    while to_tile > 8 and math.ceil(ratio * (to_tile - 1)) + 1 > 512:
        to_tile //= 2
    to_tile = min(to_tile, _round_up(n_frames, 8))
    n_frames_pad = _round_up(n_frames, to_tile)
    num_out_tiles = n_frames_pad // to_tile

    # ---- alignment indices (same formula as the torch module; static) -------
    kk = np.arange(n_frames_pad, dtype=np.float64)
    idx_full = np.minimum(np.round(ratio * kk), t_units - 1).astype(np.int64)
    idx_full = np.maximum(idx_full, 0)
    per_tile = idx_full.reshape(num_out_tiles, to_tile)      # monotone rows
    max_span = int(np.max(per_tile[:, -1] - per_tile[:, 0])) + 1
    u_tile = _round_up(max(max_span, 8), 8)                   # audio rows / window
    base_blk = (per_tile[:, 0] // u_tile).astype(np.int32)    # (num_out_tiles,)
    local_idx = (idx_full - np.repeat(base_blk.astype(np.int64), to_tile) * u_tile)
    assert local_idx.min() >= 0 and local_idx.max() <= 2 * u_tile - 2
    local_idx_j = jnp.asarray(local_idx.astype(np.int32).reshape(n_frames_pad, 1))
    base_blk_j = jnp.asarray(base_blk)

    # ---- audio framing: A[j] = audio[j*320:(j+1)*320], single bf16 stream ----
    num_a_blocks = int(base_blk.max()) + 2                    # base+1 always valid
    num_a_rows = num_a_blocks * u_tile
    total = num_a_rows * ENCODER_HOP_SIZE
    audio_flat = audio_res[0]
    audio_flat = jnp.pad(audio_flat, (0, max(0, total - t)))[:total]
    a_rows = audio_flat.reshape(num_a_rows, ENCODER_HOP_SIZE).astype(jnp.bfloat16)

    w0 = w[:ENCODER_HOP_SIZE].astype(jnp.bfloat16)            # (320, D)
    w1 = jnp.pad(w[ENCODER_HOP_SIZE:HUBERT_WIN],
                 ((0, W1_PAD - (HUBERT_WIN - ENCODER_HOP_SIZE)), (0, 0))
                 ).astype(jnp.bfloat16)                       # (128, D), rows 80.. zero
    b2 = b.reshape(1, UNITS_DIM).astype(jnp.float32)

    aligned = pl.pallas_call(
        _fused_units_kernel,
        out_shape=jax.ShapeDtypeStruct((n_frames_pad, UNITS_DIM), jnp.float32),
        grid_spec=pltpu.PrefetchScalarGridSpec(
            num_scalar_prefetch=1,                            # base_blk -> SMEM
            grid=(num_out_tiles,),
            in_specs=[
                pl.BlockSpec((to_tile, 1), lambda g, base: (g, 0)),
                pl.BlockSpec((u_tile, ENCODER_HOP_SIZE),
                             lambda g, base: (base[g], 0)),        # window A
                pl.BlockSpec((u_tile, ENCODER_HOP_SIZE),
                             lambda g, base: (base[g] + 1, 0)),    # window B
                pl.BlockSpec((ENCODER_HOP_SIZE, UNITS_DIM), lambda g, base: (0, 0)),
                pl.BlockSpec((W1_PAD, UNITS_DIM), lambda g, base: (0, 0)),
                pl.BlockSpec((1, UNITS_DIM), lambda g, base: (0, 0)),
            ],
            out_specs=pl.BlockSpec((to_tile, UNITS_DIM), lambda g, base: (g, 0)),
        ),
        compiler_params=pltpu.CompilerParams(
            dimension_semantics=("parallel",)),
    )(base_blk_j, local_idx_j, a_rows, a_rows, w0, w1, b2)

    return aligned[:n_frames][None]                           # (1, n_frames, D)


if __name__ == "__main__":
    key = jax.random.PRNGKey(0)
    k1, k2, k3 = jax.random.split(key, 3)
    # Deterministic synthetic encoder parameters (stand-in for HuBERT weights).
    w = jax.random.normal(k1, (HUBERT_WIN, UNITS_DIM), jnp.float32) / jnp.sqrt(
        jnp.float32(HUBERT_WIN))
    b = 0.01 * jax.random.normal(k2, (UNITS_DIM,), jnp.float32)
    # Small example input: 0.2 s of 16 kHz audio, batch 1.
    audio = 0.1 * jax.random.normal(k3, (1, 3200), jnp.float32)
    sample_rate = 16000
    hop_size = 480            # != encoder hop -> exercises the alignment gather

    out = units_encoder_forward(audio, sample_rate, hop_size, w, b)
    out = jax.block_until_ready(out)

    # Pure-JAX f32 reference for a sanity check of the kernel semantics.
    t = audio.shape[-1]
    t_units = (t - HUBERT_WIN) // ENCODER_HOP_SIZE + 1
    fidx = (jnp.arange(t_units)[:, None] * ENCODER_HOP_SIZE
            + jnp.arange(HUBERT_WIN)[None, :])
    units_ref = jnp.tanh(audio[0][fidx] @ w + b)
    n_frames = t // hop_size + 1
    ratio = (hop_size / sample_rate) / (ENCODER_HOP_SIZE / ENCODER_SAMPLE_RATE)
    idx = jnp.minimum(jnp.round(ratio * jnp.arange(n_frames)).astype(jnp.int32),
                      t_units - 1)
    ref = units_ref[idx][None]

    assert out.shape == (1, n_frames, UNITS_DIM), out.shape
    assert jnp.allclose(out, ref, atol=2e-2, rtol=2e-2), "mismatch vs reference"
    print("KERNEL_OK")
</pallas_src>

<mosaic_0001>
module attributes {stable_mosaic.version = 11 : i64} {
  func.func @_fused_units_kernel(%arg0: i32, %arg1: memref<1xi32, #tpu.memory_space<smem>>, %arg2: memref<8x1xi32, #tpu.memory_space<vmem>>, %arg3: memref<16x320xbf16, #tpu.memory_space<vmem>>, %arg4: memref<16x320xbf16, #tpu.memory_space<vmem>>, %arg5: memref<320x256xbf16, #tpu.memory_space<vmem>>, %arg6: memref<128x256xbf16, #tpu.memory_space<vmem>>, %arg7: memref<1x256xf32, #tpu.memory_space<vmem>>, %arg8: memref<8x256xf32, #tpu.memory_space<vmem>>) attributes {dimension_semantics = [#tpu.dimension_semantics<parallel>], iteration_bounds = array<i64: 1>, scalar_prefetch = 1 : i64, scratch_operands = 0 : i64, tpu.core_type = #tpu.core_type<tc>, window_params = [{transform_indices = @transform_0, window_bounds = array<i64: 8, 1>}, {transform_indices = @transform_1, window_bounds = array<i64: 16, 320>}, {transform_indices = @transform_2, window_bounds = array<i64: 16, 320>}, {pipeline_mode = #tpu.pipeline_mode<synchronous>, transform_indices = @transform_3, window_bounds = array<i64: 320, 256>}, {pipeline_mode = #tpu.pipeline_mode<synchronous>, transform_indices = @transform_4, window_bounds = array<i64: 128, 256>}, {pipeline_mode = #tpu.pipeline_mode<synchronous>, transform_indices = @transform_5, window_bounds = array<i64: 1, 256>}, {transform_indices = @transform_6, window_bounds = array<i64: 8, 256>}]} {
    %c0 = arith.constant 0 : index
    %c0_0 = arith.constant 0 : index
    %0 = vector.load %arg2[%c0, %c0_0] : memref<8x1xi32, #tpu.memory_space<vmem>>, vector<8x1xi32>
    %1 = tpu.iota {dimensions = array<i32: 1>} : vector<8x16xi32>
    %2 = vector.broadcast %0 : vector<8x1xi32> to vector<8x16xi32>
    %3 = arith.cmpi eq, %1, %2 : vector<8x16xi32>
    %4 = arith.extui %3 : vector<8x16xi1> to vector<8x16xi32>
    %5 = arith.sitofp %4 : vector<8x16xi32> to vector<8x16xf32>
    %6 = arith.truncf %5 : vector<8x16xf32> to vector<8x16xbf16>
    %c16_i32 = arith.constant 16 : i32
    %7 = vector.broadcast %c16_i32 : i32 to vector<8x16xi32>
    %8 = arith.addi %1, %7 : vector<8x16xi32>
    %9 = vector.broadcast %0 : vector<8x1xi32> to vector<8x16xi32>
    %10 = arith.cmpi eq, %8, %9 : vector<8x16xi32>
    %11 = arith.extui %10 : vector<8x16xi1> to vector<8x16xi32>
    %12 = arith.sitofp %11 : vector<8x16xi32> to vector<8x16xf32>
    %13 = arith.truncf %12 : vector<8x16xf32> to vector<8x16xbf16>
    %c1_i32 = arith.constant 1 : i32
    %14 = vector.broadcast %c1_i32 : i32 to vector<8x1xi32>
    %15 = arith.addi %0, %14 : vector<8x1xi32>
    %16 = vector.broadcast %15 : vector<8x1xi32> to vector<8x16xi32>
    %17 = arith.cmpi eq, %1, %16 : vector<8x16xi32>
    %18 = arith.extui %17 : vector<8x16xi1> to vector<8x16xi32>
    %19 = arith.sitofp %18 : vector<8x16xi32> to vector<8x16xf32>
    %20 = arith.truncf %19 : vector<8x16xf32> to vector<8x16xbf16>
    %c16_i32_1 = arith.constant 16 : i32
    %21 = vector.broadcast %c16_i32_1 : i32 to vector<8x16xi32>
    %22 = arith.addi %1, %21 : vector<8x16xi32>
    %c1_i32_2 = arith.constant 1 : i32
    %23 = vector.broadcast %c1_i32_2 : i32 to vector<8x1xi32>
    %24 = arith.addi %0, %23 : vector<8x1xi32>
    %25 = vector.broadcast %24 : vector<8x1xi32> to vector<8x16xi32>
    %26 = arith.cmpi eq, %22, %25 : vector<8x16xi32>
    %27 = arith.extui %26 : vector<8x16xi1> to vector<8x16xi32>
    %28 = arith.sitofp %27 : vector<8x16xi32> to vector<8x16xf32>
    %29 = arith.truncf %28 : vector<8x16xf32> to vector<8x16xbf16>
    %c0_3 = arith.constant 0 : index
    %c0_4 = arith.constant 0 : index
    %30 = vector.load %arg3[%c0_3, %c0_4] : memref<16x320xbf16, #tpu.memory_space<vmem>>, vector<16x320xbf16>
    %c0_5 = arith.constant 0 : index
    %c0_6 = arith.constant 0 : index
    %31 = vector.load %arg4[%c0_5, %c0_6] : memref<16x320xbf16, #tpu.memory_space<vmem>>, vector<16x320xbf16>
    %cst = arith.constant dense<0.000000e+00> : vector<8x320xf32>
    %32 = tpu.matmul %6, %30, %cst {dimension_numbers = #tpu.dot_dimension_numbers<[1], [0], [0], [1], [0, 0, 1, 1], [], []>} : vector<8x16xbf16>, vector<16x320xbf16>, vector<8x320xf32> -> vector<8x320xf32>
    %cst_7 = arith.constant dense<0.000000e+00> : vector<8x320xf32>
    %33 = tpu.matmul %13, %31, %cst_7 {dimension_numbers = #tpu.dot_dimension_numbers<[1], [0], [0], [1], [0, 0, 1, 1], [], []>} : vector<8x16xbf16>, vector<16x320xbf16>, vector<8x320xf32> -> vector<8x320xf32>
    %34 = arith.addf %32, %33 : vector<8x320xf32>
    %35 = arith.truncf %34 : vector<8x320xf32> to vector<8x320xbf16>
    %36 = vector.extract_strided_slice %30 {offsets = [0, 0], sizes = [16, 128], strides = [1, 1]} : vector<16x320xbf16> to vector<16x128xbf16>
    %cst_8 = arith.constant dense<0.000000e+00> : vector<8x128xf32>
    %37 = tpu.matmul %20, %36, %cst_8 {dimension_numbers = #tpu.dot_dimension_numbers<[1], [0], [0], [1], [0, 0, 1, 1], [], []>} : vector<8x16xbf16>, vector<16x128xbf16>, vector<8x128xf32> -> vector<8x128xf32>
    %38 = vector.extract_strided_slice %31 {offsets = [0, 0], sizes = [16, 128], strides = [1, 1]} : vector<16x320xbf16> to vector<16x128xbf16>
    %cst_9 = arith.constant dense<0.000000e+00> : vector<8x128xf32>
    %39 = tpu.matmul %29, %38, %cst_9 {dimension_numbers = #tpu.dot_dimension_numbers<[1], [0], [0], [1], [0, 0, 1, 1], [], []>} : vector<8x16xbf16>, vector<16x128xbf16>, vector<8x128xf32> -> vector<8x128xf32>
    %40 = arith.addf %37, %39 : vector<8x128xf32>
    %41 = arith.truncf %40 : vector<8x128xf32> to vector<8x128xbf16>
    %c0_10 = arith.constant 0 : index
    %c0_11 = arith.constant 0 : index
    %42 = vector.load %arg5[%c0_10, %c0_11] : memref<320x256xbf16, #tpu.memory_space<vmem>>, vector<320x256xbf16>
    %cst_12 = arith.constant dense<0.000000e+00> : vector<8x256xf32>
    %43 = tpu.matmul %35, %42, %cst_12 {dimension_numbers = #tpu.dot_dimension_numbers<[1], [0], [0], [1], [0, 0, 1, 1], [], []>} : vector<8x320xbf16>, vector<320x256xbf16>, vector<8x256xf32> -> vector<8x256xf32>
    %c0_13 = arith.constant 0 : index
    %c0_14 = arith.constant 0 : index
    %44 = vector.load %arg6[%c0_13, %c0_14] : memref<128x256xbf16, #tpu.memory_space<vmem>>, vector<128x256xbf16>
    %cst_15 = arith.constant dense<0.000000e+00> : vector<8x256xf32>
    %45 = tpu.matmul %41, %44, %cst_15 {dimension_numbers = #tpu.dot_dimension_numbers<[1], [0], [0], [1], [0, 0, 1, 1], [], []>} : vector<8x128xbf16>, vector<128x256xbf16>, vector<8x256xf32> -> vector<8x256xf32>
    %46 = arith.addf %43, %45 : vector<8x256xf32>
    %c0_16 = arith.constant 0 : index
    %c0_17 = arith.constant 0 : index
    %47 = vector.load %arg7[%c0_16, %c0_17] : memref<1x256xf32, #tpu.memory_space<vmem>>, vector<1x256xf32>
    %48 = vector.broadcast %47 : vector<1x256xf32> to vector<8x256xf32>
    %49 = arith.addf %46, %48 : vector<8x256xf32>
    %50 = math.tanh %49 : vector<8x256xf32>
    %c0_18 = arith.constant 0 : index
    %c0_19 = arith.constant 0 : index
    %51 = vector.load %arg8[%c0_18, %c0_19] : memref<8x256xf32, #tpu.memory_space<vmem>>, vector<8x256xf32>
    tpu.vector_store %arg8[%c0_18, %c0_19], %50 {strides = array<i32>} : memref<8x256xf32, #tpu.memory_space<vmem>>, vector<8x256xf32>,
    return
  }
  func.func @transform_0(%arg0: i32, %arg1: memref<1xi32, #tpu.memory_space<smem>>) -> (i32, i32) {
    %c0_i32 = arith.constant 0 : i32
    %c0_i32_0 = arith.constant 0 : i32
    return %arg0, %c0_i32 : i32, i32
  }
  func.func @transform_1(%arg0: i32, %arg1: memref<1xi32, #tpu.memory_space<smem>>) -> (i32, i32) {
    %0 = arith.index_cast %arg0 : i32 to index
    %1 = memref.load %arg1[%0] : memref<1xi32, #tpu.memory_space<smem>>
    %c0_i32 = arith.constant 0 : i32
    %c0_i32_0 = arith.constant 0 : i32
    return %1, %c0_i32 : i32, i32
  }
  func.func @transform_2(%arg0: i32, %arg1: memref<1xi32, #tpu.memory_space<smem>>) -> (i32, i32) {
    %0 = arith.index_cast %arg0 : i32 to index
    %1 = memref.load %arg1[%0] : memref<1xi32, #tpu.memory_space<smem>>
    %c1_i32 = arith.constant 1 : i32
    %2 = arith.addi %1, %c1_i32 : i32
    %c0_i32 = arith.constant 0 : i32
    %c0_i32_0 = arith.constant 0 : i32
    return %2, %c0_i32 : i32, i32
  }
  func.func @transform_3(%arg0: i32, %arg1: memref<1xi32, #tpu.memory_space<smem>>) -> (i32, i32) {
    %c0_i32 = arith.constant 0 : i32
    %c0_i32_0 = arith.constant 0 : i32
    %c0_i32_1 = arith.constant 0 : i32
    return %c0_i32, %c0_i32_0 : i32, i32
  }
  func.func @transform_4(%arg0: i32, %arg1: memref<1xi32, #tpu.memory_space<smem>>) -> (i32, i32) {
    %c0_i32 = arith.constant 0 : i32
    %c0_i32_0 = arith.constant 0 : i32
    %c0_i32_1 = arith.constant 0 : i32
    return %c0_i32, %c0_i32_0 : i32, i32
  }
  func.func @transform_5(%arg0: i32, %arg1: memref<1xi32, #tpu.memory_space<smem>>) -> (i32, i32) {
    %c0_i32 = arith.constant 0 : i32
    %c0_i32_0 = arith.constant 0 : i32
    %c0_i32_1 = arith.constant 0 : i32
    return %c0_i32, %c0_i32_0 : i32, i32
  }
  func.func @transform_6(%arg0: i32, %arg1: memref<1xi32, #tpu.memory_space<smem>>) -> (i32, i32) {
    %c0_i32 = arith.constant 0 : i32
    %c0_i32_0 = arith.constant 0 : i32
    return %arg0, %c0_i32 : i32, i32
  }
}

</mosaic_0001>

<llo_original>
// kernel: tpu_custom_call.1
$region0: #{tpu_custom_call.1}
  #allocation0 [shape = 'u32[]', space=smem, size = 0x4, offset = 0x4, fixed_abs, tag = 'smem constant byte address 0x4 - core index']
  #allocation1 [shape = 'u32[72,128]{1,0:T(1,128)}', space=vmem, size = 0x9000, scoped, tag = 'internal scratch']
  #allocation2 [shape = 's32[1]{0}', space=sflag, size = 0x4, scoped, tag = 'scoped memory for tpu_custom_call.1']
  #allocation3 [shape = 's32[1]{0:T(128)S(6)}', space=smem, size = 0x200, scoped, tag = 'prefetched SMEM operand 0']
  %s0 = inlined_call_operand.<no memory space> [shape: s32[1], index: 0, kind: input, shape index: {}]
  %s1 = inlined_call_operand.vmem [shape: s32[8,1], index: 1, kind: input, shape index: {}]
  %s2 = inlined_call_operand.hbm [shape: bf16[32,320], index: 2, kind: input, shape index: {}]
  %s3 = inlined_call_operand.hbm [shape: bf16[32,320], index: 3, kind: input, shape index: {}]
  %s4 = inlined_call_operand.hbm [shape: bf16[320,256], index: 4, kind: input, shape index: {}]
  %s5 = inlined_call_operand.hbm [shape: bf16[128,256], index: 5, kind: input, shape index: {}]
  %s6 = inlined_call_operand.vmem [shape: f32[1,256], index: 6, kind: input, shape index: {}]
  %s7 = inlined_call_operand.hbm [shape: f32[8,256], index: 7, kind: output, shape index: {}]
  %s8 = sld [smem:[#allocation0]]
  $region50: #{tpu_custom_call.1} parent=0
    _
  %s10 = ssub.s32 1, %s8
  %s11 = scalar_select 0, %s10, %s8
  %12 = sst [smem:[#allocation3]] %s0
  $region1: #{tpu_custom_call.1} parent=0
    #allocation4 [shape = 'u8[12288]{0}', space=vmem, size = 0x3000, scoped, tag = 'input window, operand 2, single buffered']
    #allocation5 [shape = 's32[1]{0}', space=sflag, size = 0x4, scoped, tag = 'scoped memory for tpu_custom_call.1']
    #allocation6 [shape = 's32[1]{0}', space=sflag, size = 0x4, scoped, tag = 'scoped memory for tpu_custom_call.1']
    #allocation7 [shape = 'u8[12288]{0}', space=vmem, size = 0x3000, scoped, tag = 'input window, operand 3, single buffered']
    #allocation8 [shape = 's32[1]{0}', space=sflag, size = 0x4, scoped, tag = 'scoped memory for tpu_custom_call.1']
    #allocation9 [shape = 'u8[163840]{0}', space=vmem, size = 0x28000, scoped, tag = 'input window, operand 4, single buffered']
    #allocation10 [shape = 'u8[65536]{0}', space=vmem, size = 0x10000, scoped, tag = 'input window, operand 5, single buffered']
    #allocation11 [shape = 's32[1]{0}', space=sflag, size = 0x4, scoped, tag = 'scoped memory for tpu_custom_call.1']
    #allocation12 [shape = 'u8[8192]{0}', space=vmem, size = 0x2000, scoped, tag = 'output window, operand 0, single buffered']
    %13 = vsyncpa [#allocation5], 0
    %14 = vsyncpa [#allocation8], 0
    %15 = vsyncpa [#allocation11], 0
    %16 = vsyncpa [#allocation6], 0
    // Predicated region
    $region2: #{tpu_custom_call.1} parent=1 // pred_check
      _
    $region3: #{tpu_custom_call.1} parent=1 // pred_check_branch
      %18 = sbr.rel (0) target = $region5
    $region4: #{tpu_custom_call.1} parent=1 // pred_region
      _
    $region5: #{tpu_custom_call.1} parent=1 // pred_fallthru
      _
    // Predicated region
    $region6: #{tpu_custom_call.1} parent=1 // pred_check
      _
    $region7: #{tpu_custom_call.1} parent=1 // pred_check_branch
      %20 = sbr.rel (0) target = $region9
    $region8: #{tpu_custom_call.1} parent=1 // pred_region
      %s21 = sld [smem:[#allocation3]]
      %s22 = smul.u32 2, %s21
      %24 = vsyncadd [#allocation5], 0
      %s25 = smul.addr %s22, 3
      %s26 = smul.addr %s25, 4
      %s27 = scalar_lea.hbm %s2, %s26
      %s28 = sshll.u32 %s27, 4
      %s29 = int_to_ptr.hbm [resolvable:$true] %s28
      %s30 = sshll.u32 [#allocation4], 4
      %s31 = int_to_ptr.vmem [resolvable:$true] %s30
      %36 = dma.hbm_to_vmem [thread:$0]  %s29, 384, %s31, [#allocation5], 192, 192, 12
    $region9: #{tpu_custom_call.1} parent=1 // pred_fallthru
      _
    // Predicated region
    $region10: #{tpu_custom_call.1} parent=1 // pred_check
      _
    $region11: #{tpu_custom_call.1} parent=1 // pred_check_branch
      %38 = sbr.rel (0) target = $region13
    $region12: #{tpu_custom_call.1} parent=1 // pred_region
      %s39 = sld [smem:[#allocation3]]
      %s40 = sadd.s32 %s39, 1
      %s41 = smul.u32 2, %s40
      %43 = vsyncadd [#allocation8], 0
      %s44 = smul.addr %s41, 3
      %s45 = smul.addr %s44, 4
      %s46 = scalar_lea.hbm %s3, %s45
      %s47 = sshll.u32 %s46, 4
      %s48 = int_to_ptr.hbm [resolvable:$true] %s47
      %s49 = sshll.u32 [#allocation7], 4
      %s50 = int_to_ptr.vmem [resolvable:$true] %s49
      %55 = dma.hbm_to_vmem [thread:$0]  %s48, 384, %s50, [#allocation8], 192, 192, 12
    $region13: #{tpu_custom_call.1} parent=1 // pred_fallthru
      _
    // Predicated region
    $region14: #{tpu_custom_call.1} parent=1 // pred_check
      _
    $region15: #{tpu_custom_call.1} parent=1 // pred_check_branch
      %57 = sbr.rel (0) target = $region17
    $region16: #{tpu_custom_call.1} parent=1 // pred_region
      %59 = vsyncadd [#allocation8], 0
      %s60 = sshll.u32 %s4, 4
      %s61 = int_to_ptr.hbm [resolvable:$true] %s60
      %s62 = sshll.u32 [#allocation9], 4
      %s63 = int_to_ptr.vmem [resolvable:$true] %s62
      %68 = dma.hbm_to_vmem [thread:$0]  %s61, 5120, %s63, [#allocation8], 128, 128, 8
    $region17: #{tpu_custom_call.1} parent=1 // pred_fallthru
      _
    // Predicated region
    $region18: #{tpu_custom_call.1} parent=1 // pred_check
      _
    $region19: #{tpu_custom_call.1} parent=1 // pred_check_branch
      %70 = sbr.rel (0) target = $region21
    $region20: #{tpu_custom_call.1} parent=1 // pred_region
      %72 = vsyncadd [#allocation11], 0
      %s73 = sshll.u32 %s5, 4
      %s74 = int_to_ptr.hbm [resolvable:$true] %s73
      %s75 = sshll.u32 [#allocation10], 4
      %s76 = int_to_ptr.vmem [resolvable:$true] %s75
      %81 = dma.hbm_to_vmem [thread:$0]  %s74, 2048, %s76, [#allocation11], 128, 128, 8
    $region21: #{tpu_custom_call.1} parent=1 // pred_fallthru
      _
    // Predicated region
    $region22: #{tpu_custom_call.1} parent=1 // pred_check
      _
    $region23: #{tpu_custom_call.1} parent=1 // pred_check_branch
      %83 = sbr.rel (0) target = $region25
    $region24: #{tpu_custom_call.1} parent=1 // pred_region
      _
    $region25: #{tpu_custom_call.1} parent=1 // pred_fallthru
      _
    // Predicated region
    $region26: #{tpu_custom_call.1} parent=1 // pred_check
      _
    $region27: #{tpu_custom_call.1} parent=1 // pred_check_branch
      %85 = sbr.rel (0) target = $region29
    $region28: #{tpu_custom_call.1} parent=1 // pred_region
      %87 = dma.done [#allocation5], 384
    $region29: #{tpu_custom_call.1} parent=1 // pred_fallthru
      _
    // Predicated region
    $region30: #{tpu_custom_call.1} parent=1 // pred_check
      _
    $region31: #{tpu_custom_call.1} parent=1 // pred_check_branch
      %89 = sbr.rel (0) target = $region33
    $region32: #{tpu_custom_call.1} parent=1 // pred_region
      %91 = dma.done [#allocation8], 384
    $region33: #{tpu_custom_call.1} parent=1 // pred_fallthru
      _
    // Predicated region
    $region34: #{tpu_custom_call.1} parent=1 // pred_check
      _
    $region35: #{tpu_custom_call.1} parent=1 // pred_check_branch
      %93 = sbr.rel (0) target = $region37
    $region36: #{tpu_custom_call.1} parent=1 // pred_region
      %95 = dma.done [#allocation8], 5120
    $region37: #{tpu_custom_call.1} parent=1 // pred_fallthru
      _
    // Predicated region
    $region38: #{tpu_custom_call.1} parent=1 // pred_check
      _
    $region39: #{tpu_custom_call.1} parent=1 // pred_check_branch
      %97 = sbr.rel (0) target = $region41
    $region40: #{tpu_custom_call.1} parent=1 // pred_region
      %99 = dma.done [#allocation11], 2048
    $region41: #{tpu_custom_call.1} parent=1 // pred_fallthru
      _
    %s100 = sld [smem:[#allocation3]]
    %s101 = smul.u32 2, %s100
    %s102 = sld [smem:[#allocation3]]
    %s103 = sadd.s32 %s102, 1
    %s104 = smul.u32 2, %s103
    %v106 = vld [vmem:[%s1] sm:$0xff]
    %v107 = vlaneseq
    %v108 = vand.u32 %v107, 127
    %109 = vset.pattern.permute.xlu0 0
    %110 = vperm.xlu0 %109, %v106
    %v111 = vpop.permute.xlu0 %110
    %vm112 = vcmp.eq.s32.totalorder %v108, %v111
    %v113 = vsel %vm112, 1, 0
    %v114 = vcvt.s32.f32 %v113
    %v115 = vpack.c.bf16 %v114, %v114
    %v116 = vadd.s32 %v108, 16
    %vm117 = vcmp.eq.s32.totalorder %v116, %v111
    %v118 = vsel %vm117, 1, 0
    %v119 = vcvt.s32.f32 %v118
    %v120 = vpack.c.bf16 %v119, %v119
    %v121 = vadd.s32 %v106, 1
    %122 = vset.pattern.permute.xlu0 0
    %123 = vperm.xlu0 %122, %v121
    %v124 = vpop.permute.xlu0 %123
    %vm125 = vcmp.eq.s32.totalorder %v108, %v124
    %v126 = vsel %vm125, 1, 0
    %v127 = vcvt.s32.f32 %v126
    %v128 = vpack.c.bf16 %v127, %v127
    %vm129 = vcmp.eq.s32.totalorder %v116, %v124
    %v130 = vsel %vm129, 1, 0
    %v131 = vcvt.s32.f32 %v130
    %v132 = vpack.c.bf16 %v131, %v131
    %v133 = vld [vmem:[#allocation4] sm:$0xff]
    %v134 = vld [vmem:[#allocation4 + $0x8] sm:$0xf]
    %v135 = vld [vmem:[#allocation4 + $0xc] sm:$0xff]
    %v136 = vld [vmem:[#allocation4 + $0x14] sm:$0xf]
    %v137 = vld [vmem:[#allocation7] sm:$0xff]
    %v138 = vld [vmem:[#allocation7 + $0x8] sm:$0xf]
    %v139 = vld [vmem:[#allocation7 + $0xc] sm:$0xff]
    %v140 = vld [vmem:[#allocation7 + $0x14] sm:$0xf]
    %v145 = vunpack.c.l.b16 %v137
    %v146 = vunpack.c.h.b16 %v137
    %v147 = vunpack.c.l.b16 %v138
    %v148 = vunpack.c.l.b16 %v139
    %v149 = vunpack.c.h.b16 %v139
    %v150 = vunpack.c.l.b16 %v140
    %v151 = vpack.c.b16 %v148, %v145
    %v152 = vpack.c.b16 %v149, %v146
    %v153 = vpack.c.b16 %v150, %v147
    %vm157 = vcmask 130048
    %v159 = vsel %vm157, %v120, 0
    %161 = vmatpush.bf16.msra.mxu0 0
    %162 = vmatpush.bf16.msra.mxu0 0
    %163 = vmatpush.bf16.msra.mxu0 0
    %164 = vmatpush.bf16.msra.mxu0 0
    %165 = vmatpush.bf16.msra.mxu0 0
    %166 = vmatpush.bf16.msra.mxu0 0
    %167 = vmatpush.bf16.msra.mxu0 0
    %168 = vmatpush.bf16.msra.mxu0 %v151
    %169 = vmatmul.bf16.gmra.mxu0 %v159
    %v170 = vpop.f32.mrf.mxu0
    %v171 = vadd.f32 0.0, %v170
    %v172 = vpop.f32.mrf.mxu0
    %173 = vdwg.mxu0
    %174 = vmatpush.bf16.msra.mxu0 0
    %175 = vmatpush.bf16.msra.mxu0 0
    %176 = vmatpush.bf16.msra.mxu0 0
    %177 = vmatpush.bf16.msra.mxu0 0
    %178 = vmatpush.bf16.msra.mxu0 0
    %179 = vmatpush.bf16.msra.mxu0 0
    %180 = vmatpush.bf16.msra.mxu0 0
    %181 = vmatpush.bf16.msra.mxu0 %v152
    %182 = vmatmul.bf16.gmra.mxu0 %v159
    %v183 = vpop.f32.mrf.mxu0
    %v184 = vadd.f32 0.0, %v183
    %v185 = vpop.f32.mrf.mxu0
    %186 = vdwg.mxu0
    %187 = vmatpush.bf16.msra.mxu0 0
    %188 = vmatpush.bf16.msra.mxu0 0
    %189 = vmatpush.bf16.msra.mxu0 0
    %190 = vmatpush.bf16.msra.mxu0 0
    %191 = vmatpush.bf16.msra.mxu0 0
    %192 = vmatpush.bf16.msra.mxu0 0
    %193 = vmatpush.bf16.msra.mxu0 0
    %194 = vmatpush.bf16.msra.mxu0 %v153
    %195 = vmatmul.bf16.gmra.mxu0 %v159
    %v196 = vpop.f32.mrf.mxu0
    %v197 = vadd.f32 0.0, %v196
    %v198 = vpop.f32.mrf.mxu0
    %199 = vdwg.mxu0
    %v204 = vunpack.c.l.b16 %v133
    %v205 = vunpack.c.h.b16 %v133
    %v206 = vunpack.c.l.b16 %v134
    %v207 = vunpack.c.l.b16 %v135
    %v208 = vunpack.c.h.b16 %v135
    %v209 = vunpack.c.l.b16 %v136
    %v210 = vpack.c.b16 %v207, %v204
    %v211 = vpack.c.b16 %v208, %v205
    %v212 = vpack.c.b16 %v209, %v206
    %v217 = vsel %vm157, %v115, 0
    %219 = vmatpush.bf16.msra.mxu0 0
    %220 = vmatpush.bf16.msra.mxu0 0
    %221 = vmatpush.bf16.msra.mxu0 0
    %222 = vmatpush.bf16.msra.mxu0 0
    %223 = vmatpush.bf16.msra.mxu0 0
    %224 = vmatpush.bf16.msra.mxu0 0
    %225 = vmatpush.bf16.msra.mxu0 0
    %226 = vmatpush.bf16.msra.mxu0 %v210
    %227 = vmatmul.bf16.gmra.mxu0 %v217
    %v228 = vpop.f32.mrf.mxu0
    %v229 = vadd.f32 %v171, %v228
    %v230 = vpop.f32.mrf.mxu0
    %231 = vdwg.mxu0
    %232 = vmatpush.bf16.msra.mxu0 0
    %233 = vmatpush.bf16.msra.mxu0 0
    %234 = vmatpush.bf16.msra.mxu0 0
    %235 = vmatpush.bf16.msra.mxu0 0
    %236 = vmatpush.bf16.msra.mxu0 0
    %237 = vmatpush.bf16.msra.mxu0 0
    %238 = vmatpush.bf16.msra.mxu0 0
    %239 = vmatpush.bf16.msra.mxu0 %v211
    %240 = vmatmul.bf16.gmra.mxu0 %v217
    %v241 = vpop.f32.mrf.mxu0
    %v242 = vadd.f32 %v184, %v241
    %v243 = vpop.f32.mrf.mxu0
    %244 = vdwg.mxu0
    %245 = vmatpush.bf16.msra.mxu0 0
    %246 = vmatpush.bf16.msra.mxu0 0
    %247 = vmatpush.bf16.msra.mxu0 0
    %248 = vmatpush.bf16.msra.mxu0 0
    %249 = vmatpush.bf16.msra.mxu0 0
    %250 = vmatpush.bf16.msra.mxu0 0
    %251 = vmatpush.bf16.msra.mxu0 0
    %252 = vmatpush.bf16.msra.mxu0 %v212
    %253 = vmatmul.bf16.gmra.mxu0 %v217
    %v254 = vpop.f32.mrf.mxu0
    %v255 = vadd.f32 %v197, %v254
    %v256 = vpop.f32.mrf.mxu0
    %257 = vdwg.mxu0
    %v258 = vpack.c.bf16 %v229, %v229
    %v259 = vpack.c.bf16 %v242, %v242
    %v260 = vpack.c.bf16 %v255, %v255
    %v262 = vsel %vm157, %v132, 0
    %264 = vmatpush.bf16.msra.mxu0 0
    %265 = vmatpush.bf16.msra.mxu0 0
    %266 = vmatpush.bf16.msra.mxu0 0
    %267 = vmatpush.bf16.msra.mxu0 0
    %268 = vmatpush.bf16.msra.mxu0 0
    %269 = vmatpush.bf16.msra.mxu0 0
    %270 = vmatpush.bf16.msra.mxu0 0
    %271 = vmatpush.bf16.msra.mxu0 %v151
    %272 = vmatmul.bf16.gmra.mxu0 %v262
    %v273 = vpop.f32.mrf.mxu0
    %v274 = vadd.f32 0.0, %v273
    %v275 = vpop.f32.mrf.mxu0
    %276 = vdwg.mxu0
    %v278 = vsel %vm157, %v128, 0
    %280 = vmatpush.bf16.msra.mxu0 0
    %281 = vmatpush.bf16.msra.mxu0 0
    %282 = vmatpush.bf16.msra.mxu0 0
    %283 = vmatpush.bf16.msra.mxu0 0
    %284 = vmatpush.bf16.msra.mxu0 0
    %285 = vmatpush.bf16.msra.mxu0 0
    %286 = vmatpush.bf16.msra.mxu0 0
    %287 = vmatpush.bf16.msra.mxu0 %v210
    %288 = vmatmul.bf16.gmra.mxu0 %v278
    %v289 = vpop.f32.mrf.mxu0
    %v290 = vadd.f32 %v274, %v289
    %v291 = vpop.f32.mrf.mxu0
    %292 = vdwg.mxu0
    %v293 = vpack.c.bf16 %v290, %v290
    %v294 = vld [vmem:[#allocation9] sm:$0xff]
    %v295 = vld [vmem:[#allocation9 + $0x8] sm:$0xff]
    %v296 = vld [vmem:[#allocation9 + $0x10] sm:$0xff]
    %v297 = vld [vmem:[#allocation9 + $0x18] sm:$0xff]
    %v298 = vld [vmem:[#allocation9 + $0x20] sm:$0xff]
    %v299 = vld [vmem:[#allocation9 + $0x28] sm:$0xff]
    %v300 = vld [vmem:[#allocation9 + $0x30] sm:$0xff]
    %v301 = vld [vmem:[#allocation9 + $0x38] sm:$0xff]
    %v302 = vld [vmem:[#allocation9 + $0x40] sm:$0xff]
    %v303 = vld [vmem:[#allocation9 + $0x48] sm:$0xff]
    %v304 = vld [vmem:[#allocation9 + $0x50] sm:$0xff]
    %v305 = vld [vmem:[#allocation9 + $0x58] sm:$0xff]
    %v306 = vld [vmem:[#allocation9 + $0x60] sm:$0xff]
    %v307 = vld [vmem:[#allocation9 + $0x68] sm:$0xff]
    %v308 = vld [vmem:[#allocation9 + $0x70] sm:$0xff]
    %v309 = vld [vmem:[#allocation9 + $0x78] sm:$0xff]
    %v310 = vld [vmem:[#allocation9 + $0x80] sm:$0xff]
    %v311 = vld [vmem:[#allocation9 + $0x88] sm:$0xff]
    %v312 = vld [vmem:[#allocation9 + $0x90] sm:$0xff]
    %v313 = vld [vmem:[#allocation9 + $0x98] sm:$0xff]
    %v314 = vld [vmem:[#allocation9 + $0xa0] sm:$0xff]
    %v315 = vld [vmem:[#allocation9 + $0xa8] sm:$0xff]
    %v316 = vld [vmem:[#allocation9 + $0xb0] sm:$0xff]
    %v317 = vld [vmem:[#allocation9 + $0xb8] sm:$0xff]
    %v318 = vld [vmem:[#allocation9 + $0xc0] sm:$0xff]
    %v319 = vld [vmem:[#allocation9 + $0xc8] sm:$0xff]
    %v320 = vld [vmem:[#allocation9 + $0xd0] sm:$0xff]
    %v321 = vld [vmem:[#allocation9 + $0xd8] sm:$0xff]
    %v322 = vld [vmem:[#allocation9 + $0xe0] sm:$0xff]
    %v323 = vld [vmem:[#allocation9 + $0xe8] sm:$0xff]
    %v324 = vld [vmem:[#allocation9 + $0xf0] sm:$0xff]
    %v325 = vld [vmem:[#allocation9 + $0xf8] sm:$0xff]
    %v326 = vld [vmem:[#allocation9 + $0x100] sm:$0xff]
    %v327 = vld [vmem:[#allocation9 + $0x108] sm:$0xff]
    %v328 = vld [vmem:[#allocation9 + $0x110] sm:$0xff]
    %v329 = vld [vmem:[#allocation9 + $0x118] sm:$0xff]
    %v330 = vld [vmem:[#allocation9 + $0x120] sm:$0xff]
    %v331 = vld [vmem:[#allocation9 + $0x128] sm:$0xff]
    %v332 = vld [vmem:[#allocation9 + $0x130] sm:$0xff]
    %v333 = vld [vmem:[#allocation9 + $0x138] sm:$0xff]
    %v334 = vld [vmem:[#allocation10] sm:$0xff]
    %v335 = vld [vmem:[#allocation10 + $0x8] sm:$0xff]
    %v336 = vld [vmem:[#allocation10 + $0x10] sm:$0xff]
    %v337 = vld [vmem:[#allocation10 + $0x18] sm:$0xff]
    %v338 = vld [vmem:[#allocation10 + $0x20] sm:$0xff]
    %v339 = vld [vmem:[#allocation10 + $0x28] sm:$0xff]
    %v340 = vld [vmem:[#allocation10 + $0x30] sm:$0xff]
    %v341 = vld [vmem:[#allocation10 + $0x38] sm:$0xff]
    %v342 = vld [vmem:[#allocation10 + $0x40] sm:$0xff]
    %v343 = vld [vmem:[#allocation10 + $0x48] sm:$0xff]
    %v344 = vld [vmem:[#allocation10 + $0x50] sm:$0xff]
    %v345 = vld [vmem:[#allocation10 + $0x58] sm:$0xff]
    %v346 = vld [vmem:[#allocation10 + $0x60] sm:$0xff]
    %v347 = vld [vmem:[#allocation10 + $0x68] sm:$0xff]
    %v348 = vld [vmem:[#allocation10 + $0x70] sm:$0xff]
    %v349 = vld [vmem:[#allocation10 + $0x78] sm:$0xff]
    %v366 = vunpack.c.l.b16 %v334
    %v367 = vunpack.c.h.b16 %v334
    %v368 = vunpack.c.l.b16 %v335
    %v369 = vunpack.c.h.b16 %v335
    %v370 = vunpack.c.l.b16 %v336
    %v371 = vunpack.c.h.b16 %v336
    %v372 = vunpack.c.l.b16 %v337
    %v373 = vunpack.c.h.b16 %v337
    %v374 = vunpack.c.l.b16 %v338
    %v375 = vunpack.c.h.b16 %v338
    %v376 = vunpack.c.l.b16 %v339
    %v377 = vunpack.c.h.b16 %v339
    %v378 = vunpack.c.l.b16 %v340
    %v379 = vunpack.c.h.b16 %v340
    %v380 = vunpack.c.l.b16 %v341
    %v381 = vunpack.c.h.b16 %v341
    %v382 = vunpack.c.l.b16 %v342
    %v383 = vunpack.c.h.b16 %v342
    %v384 = vunpack.c.l.b16 %v343
    %v385 = vunpack.c.h.b16 %v343
    %v386 = vunpack.c.l.b16 %v344
    %v387 = vunpack.c.h.b16 %v344
    %v388 = vunpack.c.l.b16 %v345
    %v389 = vunpack.c.h.b16 %v345
    %v390 = vunpack.c.l.b16 %v346
    %v391 = vunpack.c.h.b16 %v346
    %v392 = vunpack.c.l.b16 %v347
    %v393 = vunpack.c.h.b16 %v347
    %v394 = vunpack.c.l.b16 %v348
    %v395 = vunpack.c.h.b16 %v348
    %v396 = vunpack.c.l.b16 %v349
    %v397 = vunpack.c.h.b16 %v349
    %v398 = vpack.c.b16 %v368, %v366
    %v399 = vpack.c.b16 %v369, %v367
    %v400 = vpack.c.b16 %v372, %v370
    %v401 = vpack.c.b16 %v373, %v371
    %v402 = vpack.c.b16 %v376, %v374
    %v403 = vpack.c.b16 %v377, %v375
    %v404 = vpack.c.b16 %v380, %v378
    %v405 = vpack.c.b16 %v381, %v379
    %v406 = vpack.c.b16 %v384, %v382
    %v407 = vpack.c.b16 %v385, %v383
    %v408 = vpack.c.b16 %v388, %v386
    %v409 = vpack.c.b16 %v389, %v387
    %v410 = vpack.c.b16 %v392, %v390
    %v411 = vpack.c.b16 %v393, %v391
    %v412 = vpack.c.b16 %v396, %v394
    %v413 = vpack.c.b16 %v397, %v395
    %430 = vmatpush.bf16.msra.mxu0 %v412
    %431 = vmatpush.bf16.msra.mxu0 %v410
    %432 = vmatpush.bf16.msra.mxu0 %v408
    %433 = vmatpush.bf16.msra.mxu0 %v406
    %434 = vmatpush.bf16.msra.mxu0 %v404
    %435 = vmatpush.bf16.msra.mxu0 %v402
    %436 = vmatpush.bf16.msra.mxu0 %v400
    %437 = vmatpush.bf16.msra.mxu0 %v398
    %438 = vmatmul.bf16.gmra.mxu0 %v293
    %v439 = vpop.f32.mrf.mxu0
    %v440 = vadd.f32 0.0, %v439
    %v441 = vpop.f32.mrf.mxu0
    %442 = vdwg.mxu0
    %443 = vmatpush.bf16.msra.mxu0 %v413
    %444 = vmatpush.bf16.msra.mxu0 %v411
    %445 = vmatpush.bf16.msra.mxu0 %v409
    %446 = vmatpush.bf16.msra.mxu0 %v407
    %447 = vmatpush.bf16.msra.mxu0 %v405
    %448 = vmatpush.bf16.msra.mxu0 %v403
    %449 = vmatpush.bf16.msra.mxu0 %v401
    %450 = vmatpush.bf16.msra.mxu0 %v399
    %451 = vmatmul.bf16.gmra.mxu0 %v293
    %v452 = vpop.f32.mrf.mxu0
    %v453 = vadd.f32 0.0, %v452
    %v454 = vpop.f32.mrf.mxu0
    %455 = vdwg.mxu0
    %v496 = vunpack.c.l.b16 %v294
    %v497 = vunpack.c.h.b16 %v294
    %v498 = vunpack.c.l.b16 %v295
    %v499 = vunpack.c.h.b16 %v295
    %v500 = vunpack.c.l.b16 %v296
    %v501 = vunpack.c.h.b16 %v296
    %v502 = vunpack.c.l.b16 %v297
    %v503 = vunpack.c.h.b16 %v297
    %v504 = vunpack.c.l.b16 %v298
    %v505 = vunpack.c.h.b16 %v298
    %v506 = vunpack.c.l.b16 %v299
    %v507 = vunpack.c.h.b16 %v299
    %v508 = vunpack.c.l.b16 %v300
    %v509 = vunpack.c.h.b16 %v300
    %v510 = vunpack.c.l.b16 %v301
    %v511 = vunpack.c.h.b16 %v301
    %v512 = vunpack.c.l.b16 %v302
    %v513 = vunpack.c.h.b16 %v302
    %v514 = vunpack.c.l.b16 %v303
    %v515 = vunpack.c.h.b16 %v303
    %v516 = vunpack.c.l.b16 %v304
    %v517 = vunpack.c.h.b16 %v304
    %v518 = vunpack.c.l.b16 %v305
    %v519 = vunpack.c.h.b16 %v305
    %v520 = vunpack.c.l.b16 %v306
    %v521 = vunpack.c.h.b16 %v306
    %v522 = vunpack.c.l.b16 %v307
    %v523 = vunpack.c.h.b16 %v307
    %v524 = vunpack.c.l.b16 %v308
    %v525 = vunpack.c.h.b16 %v308
    %v526 = vunpack.c.l.b16 %v309
    %v527 = vunpack.c.h.b16 %v309
    %v528 = vunpack.c.l.b16 %v310
    %v529 = vunpack.c.h.b16 %v310
    %v530 = vunpack.c.l.b16 %v311
    %v531 = vunpack.c.h.b16 %v311
    %v532 = vunpack.c.l.b16 %v312
    %v533 = vunpack.c.h.b16 %v312
    %v534 = vunpack.c.l.b16 %v313
    %v535 = vunpack.c.h.b16 %v313
    %v536 = vunpack.c.l.b16 %v314
    %v537 = vunpack.c.h.b16 %v314
    %v538 = vunpack.c.l.b16 %v315
    %v539 = vunpack.c.h.b16 %v315
    %v540 = vunpack.c.l.b16 %v316
    %v541 = vunpack.c.h.b16 %v316
    %v542 = vunpack.c.l.b16 %v317
    %v543 = vunpack.c.h.b16 %v317
    %v544 = vunpack.c.l.b16 %v318
    %v545 = vunpack.c.h.b16 %v318
    %v546 = vunpack.c.l.b16 %v319
    %v547 = vunpack.c.h.b16 %v319
    %v548 = vunpack.c.l.b16 %v320
    %v549 = vunpack.c.h.b16 %v320
    %v550 = vunpack.c.l.b16 %v321
    %v551 = vunpack.c.h.b16 %v321
    %v552 = vunpack.c.l.b16 %v322
    %v553 = vunpack.c.h.b16 %v322
    %v554 = vunpack.c.l.b16 %v323
    %v555 = vunpack.c.h.b16 %v323
    %v556 = vunpack.c.l.b16 %v324
    %v557 = vunpack.c.h.b16 %v324
    %v558 = vunpack.c.l.b16 %v325
    %v559 = vunpack.c.h.b16 %v325
    %v560 = vunpack.c.l.b16 %v326
    %v561 = vunpack.c.h.b16 %v326
    %v562 = vunpack.c.l.b16 %v327
    %v563 = vunpack.c.h.b16 %v327
    %v564 = vunpack.c.l.b16 %v328
    %v565 = vunpack.c.h.b16 %v328
    %v566 = vunpack.c.l.b16 %v329
    %v567 = vunpack.c.h.b16 %v329
    %v568 = vunpack.c.l.b16 %v330
    %v569 = vunpack.c.h.b16 %v330
    %v570 = vunpack.c.l.b16 %v331
    %v571 = vunpack.c.h.b16 %v331
    %v572 = vunpack.c.l.b16 %v332
    %v573 = vunpack.c.h.b16 %v332
    %v574 = vunpack.c.l.b16 %v333
    %v575 = vunpack.c.h.b16 %v333
    %v576 = vpack.c.b16 %v498, %v496
    %v577 = vpack.c.b16 %v499, %v497
    %v578 = vpack.c.b16 %v502, %v500
    %v579 = vpack.c.b16 %v503, %v501
    %v580 = vpack.c.b16 %v506, %v504
    %v581 = vpack.c.b16 %v507, %v505
    %v582 = vpack.c.b16 %v510, %v508
    %v583 = vpack.c.b16 %v511, %v509
    %v584 = vpack.c.b16 %v514, %v512
    %v585 = vpack.c.b16 %v515, %v513
    %v586 = vpack.c.b16 %v518, %v516
    %v587 = vpack.c.b16 %v519, %v517
    %v588 = vpack.c.b16 %v522, %v520
    %v589 = vpack.c.b16 %v523, %v521
    %v590 = vpack.c.b16 %v526, %v524
    %v591 = vpack.c.b16 %v527, %v525
    %v592 = vpack.c.b16 %v530, %v528
    %v593 = vpack.c.b16 %v531, %v529
    %v594 = vpack.c.b16 %v534, %v532
    %v595 = vpack.c.b16 %v535, %v533
    %v596 = vpack.c.b16 %v538, %v536
    %v597 = vpack.c.b16 %v539, %v537
    %v598 = vpack.c.b16 %v542, %v540
    %v599 = vpack.c.b16 %v543, %v541
    %v600 = vpack.c.b16 %v546, %v544
    %v601 = vpack.c.b16 %v547, %v545
    %v602 = vpack.c.b16 %v550, %v548
    %v603 = vpack.c.b16 %v551, %v549
    %v604 = vpack.c.b16 %v554, %v552
    %v605 = vpack.c.b16 %v555, %v553
    %v606 = vpack.c.b16 %v558, %v556
    %v607 = vpack.c.b16 %v559, %v557
    %v608 = vpack.c.b16 %v562, %v560
    %v609 = vpack.c.b16 %v563, %v561
    %v610 = vpack.c.b16 %v566, %v564
    %v611 = vpack.c.b16 %v567, %v565
    %v612 = vpack.c.b16 %v570, %v568
    %v613 = vpack.c.b16 %v571, %v569
    %v614 = vpack.c.b16 %v574, %v572
    %v615 = vpack.c.b16 %v575, %v573
    %vm656 = vcmask 523264
    %v658 = vsel %vm656, %v260, 0
    %660 = vmatpush.bf16.msra.mxu0 %v590
    %661 = vmatpush.bf16.msra.mxu0 %v588
    %662 = vmatpush.bf16.msra.mxu0 %v586
    %663 = vmatpush.bf16.msra.mxu0 %v584
    %664 = vmatpush.bf16.msra.mxu0 %v582
    %665 = vmatpush.bf16.msra.mxu0 %v580
    %666 = vmatpush.bf16.msra.mxu0 %v578
    %667 = vmatpush.bf16.msra.mxu0 %v576
    %668 = vmatmul.bf16.gmra.mxu0 %v258
    %v669 = vpop.f32.mrf.mxu0
    %v670 = vadd.f32 %v440, %v669
    %v671 = vpop.f32.mrf.mxu0
    %672 = vdwg.mxu0
    %673 = vmatpush.bf16.msra.mxu0 %v606
    %674 = vmatpush.bf16.msra.mxu0 %v604
    %675 = vmatpush.bf16.msra.mxu0 %v602
    %676 = vmatpush.bf16.msra.mxu0 %v600
    %677 = vmatpush.bf16.msra.mxu0 %v598
    %678 = vmatpush.bf16.msra.mxu0 %v596
    %679 = vmatpush.bf16.msra.mxu0 %v594
    %680 = vmatpush.bf16.msra.mxu0 %v592
    %681 = vmatmul.bf16.gmra.mxu0 %v259
    %v682 = vpop.f32.mrf.mxu0
    %v683 = vadd.f32 %v670, %v682
    %v684 = vpop.f32.mrf.mxu0
    %685 = vdwg.mxu0
    %686 = vmatpush.bf16.msra.mxu0 0
    %687 = vmatpush.bf16.msra.mxu0 0
    %688 = vmatpush.bf16.msra.mxu0 0
    %689 = vmatpush.bf16.msra.mxu0 0
    %690 = vmatpush.bf16.msra.mxu0 %v614
    %691 = vmatpush.bf16.msra.mxu0 %v612
    %692 = vmatpush.bf16.msra.mxu0 %v610
    %693 = vmatpush.bf16.msra.mxu0 %v608
    %694 = vmatmul.bf16.gmra.mxu0 %v658
    %v695 = vpop.f32.mrf.mxu0
    %v696 = vadd.f32 %v683, %v695
    %v697 = vpop.f32.mrf.mxu0
    %698 = vdwg.mxu0
    %699 = vmatpush.bf16.msra.mxu0 %v591
    %700 = vmatpush.bf16.msra.mxu0 %v589
    %701 = vmatpush.bf16.msra.mxu0 %v587
    %702 = vmatpush.bf16.msra.mxu0 %v585
    %703 = vmatpush.bf16.msra.mxu0 %v583
    %704 = vmatpush.bf16.msra.mxu0 %v581
    %705 = vmatpush.bf16.msra.mxu0 %v579
    %706 = vmatpush.bf16.msra.mxu0 %v577
    %707 = vmatmul.bf16.gmra.mxu0 %v258
    %v708 = vpop.f32.mrf.mxu0
    %v709 = vadd.f32 %v453, %v708
    %v710 = vpop.f32.mrf.mxu0
    %711 = vdwg.mxu0
    %712 = vmatpush.bf16.msra.mxu0 %v607
    %713 = vmatpush.bf16.msra.mxu0 %v605
    %714 = vmatpush.bf16.msra.mxu0 %v603
    %715 = vmatpush.bf16.msra.mxu0 %v601
    %716 = vmatpush.bf16.msra.mxu0 %v599
    %717 = vmatpush.bf16.msra.mxu0 %v597
    %718 = vmatpush.bf16.msra.mxu0 %v595
    %719 = vmatpush.bf16.msra.mxu0 %v593
    %720 = vmatmul.bf16.gmra.mxu0 %v259
    %v721 = vpop.f32.mrf.mxu0
    %v722 = vadd.f32 %v709, %v721
    %v723 = vpop.f32.mrf.mxu0
    %724 = vdwg.mxu0
    %725 = vmatpush.bf16.msra.mxu0 0
    %726 = vmatpush.bf16.msra.mxu0 0
    %727 = vmatpush.bf16.msra.mxu0 0
    %728 = vmatpush.bf16.msra.mxu0 0
    %729 = vmatpush.bf16.msra.mxu0 %v615
    %730 = vmatpush.bf16.msra.mxu0 %v613
    %731 = vmatpush.bf16.msra.mxu0 %v611
    %732 = vmatpush.bf16.msra.mxu0 %v609
    %733 = vmatmul.bf16.gmra.mxu0 %v658
    %v734 = vpop.f32.mrf.mxu0
    %v735 = vadd.f32 %v722, %v734
    %v736 = vpop.f32.mrf.mxu0
    %737 = vdwg.mxu0
    %v738 = vld [vmem:[%s6] sm:$0x3]
    %v740 = vperm.slane %v738, 0
    %v741 = vperm.slane %v738, 1
    %v744 = vadd.f32 %v696, %v740
    %v745 = vadd.f32 %v735, %v741
    %v746 = vtanh.pop %v744
    %v747 = vtanh.pop %v745
    %748 = vst [vmem:[#allocation12] sm:$0xff] %v746
    %749 = vst [vmem:[#allocation12 + $0x8] sm:$0xff] %v747
    // Predicated region
    $region42: #{tpu_custom_call.1} parent=1 // pred_check
      _
    $region43: #{tpu_custom_call.1} parent=1 // pred_check_branch
      %751 = sbr.rel (0) target = $region45
    $region44: #{tpu_custom_call.1} parent=1 // pred_region
      %753 = vsyncadd [#allocation6], 0
      %s755 = sshll.u32 [#allocation12], 4
      %s756 = int_to_ptr.vmem [resolvable:$true] %s755
      %s757 = sshll.u32 %s7, 4
      %s758 = int_to_ptr.hbm [resolvable:$true] %s757
      %760 = dma.vmem_to_hbm [thread:$0]  %s756, 256, %s758, [#allocation6]
    $region45: #{tpu_custom_call.1} parent=1 // pred_fallthru
      _
    // Predicated region
    $region46: #{tpu_custom_call.1} parent=1 // pred_check
      _
    $region47: #{tpu_custom_call.1} parent=1 // pred_check_branch
      %762 = sbr.rel (0) target = $region49
    $region48: #{tpu_custom_call.1} parent=1 // pred_region
      %764 = dma.done [#allocation6], 256
    $region49: #{tpu_custom_call.1} parent=1 // pred_fallthru
      _
    %765 = vsyncpa [#allocation5], 1
    %766 = vsyncpa [#allocation8], 1
    %767 = vsyncpa [#allocation11], 1
    %768 = vsyncpa [#allocation6], 1

</llo_original>
